<compile_context>
chip_gen: v5e
topology: v5e:2x2
jax: 0.10.0
libtpu: 0.0.40
codegen_flags: <defaults>
</compile_context>

<pallas_src>
import functools

import jax
import jax.numpy as jnp
from jax.experimental import pallas as pl
from jax.experimental.pallas import tpu as pltpu


_MAX_TM = 1024                       # row-tile cap (multiple of the 256-wide MXU)
_MAX_FOLD_BYTES = 8 * 1024 * 1024    # double-buffered (folded) bf16 W1 must fit this


# ----------------------------------------------------------------------------
# Kernels
# ----------------------------------------------------------------------------
def slam_fused_kernel(feat_ref, w1_ref, b1_ref, w2_ref, b2_ref, out_ref):
    """Single-pass path: the gated rows ARE the MLP input (one HBM read)."""
    feat = feat_ref[...]                                      # (tm, hw) feature rows
    # Linear(hw -> hidden) + ReLU: bf16 operands, f32 MXU accumulation.
    h = jnp.dot(feat.astype(jnp.bfloat16), w1_ref[...],
                preferred_element_type=jnp.float32)
    h = jnp.maximum(h + b1_ref[...], 0.0)                     # (tm, hidden) f32
    # Linear(hidden -> 1): N=1 matmul as VPU multiply + XLU lane reduction.
    logit = jnp.sum(h * w2_ref[...], axis=-1, keepdims=True) + b2_ref[0, 0]
    a = jax.nn.sigmoid(logit)                                 # (tm, 1) f32
    out_ref[...] = feat * a.astype(out_ref.dtype)             # gate in feature dtype


def slam_attn_kernel(x_ref, w1_ref, b1_ref, w2_ref, b2_ref, a_ref):
    """Attention MLP on the small resized descriptor -> (tm, 1) gate values."""
    h = jnp.dot(x_ref[...], w1_ref[...], preferred_element_type=jnp.float32)
    h = jnp.maximum(h + b1_ref[...], 0.0)
    logit = jnp.sum(h * w2_ref[...], axis=-1, keepdims=True) + b2_ref[0, 0]
    a_ref[...] = jax.nn.sigmoid(logit)


def slam_gate_kernel(a_ref, feat_ref, out_ref):
    """Pure streaming gate: grid (row_blocks, hw_blocks), both axes parallel."""
    out_ref[...] = feat_ref[...] * a_ref[...].astype(out_ref.dtype)


# ----------------------------------------------------------------------------
# Tiling helpers (static Python, evaluated at trace time)
# ----------------------------------------------------------------------------
def _vmem_budgets():
    """(vmem_limit_bytes, pipelined-tile budget) sized to the local chip's VMEM."""
    cap = 64 * 1024 * 1024
    try:
        cap = int(getattr(pltpu.get_tpu_info(), "vmem_capacity_bytes", cap))
    except Exception:                 # non-TPU backend / older API: assume 64 MiB
        pass
    if cap >= 128 * 1024 * 1024:      # v5e / v6e 128-MiB parts
        return 64 * 1024 * 1024, 44 * 1024 * 1024
    return 32 * 1024 * 1024, 16 * 1024 * 1024   # v7x-class 64-MiB parts


def _row_tiling(m, cap):
    """Row tile <= cap: divisor of the (possibly padded) row count, multiple of 8."""
    cap = int(max(8, cap))
    if m <= cap:
        return m, m                   # single block of all rows, no padding
    t = (cap // 8) * 8
    while t >= 8:
        if m % t == 0:
            return t, m               # exact divisor -> no pad / extra copies
        t -= 8
    t = max(8, (cap // 8) * 8)        # rare fallback: minimal row padding
    return t, m + ((-m) % t)


def _prefer_two_blocks(mp, tm, row_bytes):
    """v7x has 2 TensorCores: avoid a 1-block parallel axis when halves stay >=1 MiB."""
    if tm == mp and mp % 16 == 0 and (mp // 2) * row_bytes >= (1 << 20):
        return mp // 2
    return tm


def _pick_hw_tile(hw, cap_elems):
    """Largest multiple-of-128 divisor of hw <= cap_elems (full row if none)."""
    if hw <= cap_elems:
        return hw
    if hw % 128 != 0:
        # TODO(synk): lane-pad H*W to a multiple of 128 so pathological sizes keep
        # lane-dense stores and bounded VMEM; full-row blocks are correct but larger.
        return hw
    t = (min(cap_elems, hw) // 128) * 128
    while t >= 128:
        if hw % t == 0:
            return t
        t -= 128
    return hw


def _interp_matrix(out_size, in_size):
    """(out_size, in_size) bilinear weights, align_corners=True (hat function)."""
    pos = jnp.linspace(0.0, float(in_size - 1), out_size)
    idx = jnp.arange(in_size, dtype=jnp.float32)
    return jnp.maximum(0.0, 1.0 - jnp.abs(pos[:, None] - idx[None, :]))


def _resize_bilinear_ac(x, out_h, out_w):
    """NCHW align_corners=True bilinear resize via two separable MXU matmuls."""
    n, c, h, w = x.shape
    if h == out_h and w == out_w:
        return x
    ry = _interp_matrix(out_h, h)                       # (out_h, H)
    rx = _interp_matrix(out_w, w)                       # (out_w, W)
    t = jnp.einsum('sh,nchw->ncsw', ry, x.astype(jnp.float32))
    return jnp.einsum('tw,ncsw->ncst', rx, t)           # (n, c, out_h, out_w)


# ----------------------------------------------------------------------------
# Wrapper
# ----------------------------------------------------------------------------
@functools.partial(jax.jit, static_argnames=("spatial_dim",))
def slam_forward(feature, w1, b1, w2, b2, *, spatial_dim):
    """feature: NCHW. Returns sigmoid(MLP(flatten(resize(feature)))) * feature."""
    n, c, h, w = feature.shape
    s2 = spatial_dim * spatial_dim
    hidden = w1.shape[1]
    m, hw = n * c, h * w
    itemsize = jnp.dtype(feature.dtype).itemsize
    vmem_limit, budget = _vmem_budgets()

    no_resize = (h == spatial_dim and w == spatial_dim)
    b1_row = b1.reshape(1, hidden).astype(jnp.float32)
    w2_row = w2.reshape(1, hidden).astype(jnp.float32)
    b2_s = b2.reshape(1, 1).astype(jnp.float32)
    feat_flat = feature.reshape(m, hw)

    fused_weight_bytes = 2 * hw * hidden * 2            # double-buffered bf16 W1(_eff)
    if fused_weight_bytes <= _MAX_FOLD_BYTES:
        # ---- single-pass fused path: feature rows read from HBM exactly once -----
        if no_resize:
            w1_in = w1.astype(jnp.bfloat16)                        # (hw == s2, hidden)
        else:
            # Fold the bilinear resize into the first Linear: W1_eff = R^T @ W1.
            ry = _interp_matrix(spatial_dim, h)                    # (S, H)
            rx = _interp_matrix(spatial_dim, w)                    # (S, W)
            w1r = w1.reshape(spatial_dim, spatial_dim, hidden).astype(jnp.float32)
            w1_in = jnp.einsum('tw,htk->hwk', rx,
                               jnp.einsum('sh,stk->htk', ry, w1r))
            w1_in = w1_in.reshape(hw, hidden).astype(jnp.bfloat16)

        # in + out tiles double-buffered, bf16 cast, f32 hidden activations
        row_bytes = 4 * hw * itemsize + 2 * hw + 4 * hidden
        avail = max(budget - fused_weight_bytes - 8 * hidden * 4, 2 * 1024 * 1024)
        tm, mp = _row_tiling(m, min(_MAX_TM, max(8, avail // row_bytes)))
        tm = _prefer_two_blocks(mp, tm, row_bytes)
        if mp != m:
            feat_flat = jnp.pad(feat_flat, ((0, mp - m), (0, 0)))

        out_flat = pl.pallas_call(
            slam_fused_kernel,
            out_shape=jax.ShapeDtypeStruct((mp, hw), feature.dtype),
            grid_spec=pltpu.PrefetchScalarGridSpec(
                num_scalar_prefetch=0,
                grid=(mp // tm,),
                in_specs=[
                    pl.BlockSpec((tm, hw), lambda i: (i, 0)),           # feature rows
                    pl.BlockSpec((hw, hidden), lambda i: (0, 0)),       # W1 / W1_eff
                    pl.BlockSpec((1, hidden), lambda i: (0, 0)),        # b1
                    pl.BlockSpec((1, hidden), lambda i: (0, 0)),        # w2 row
                    pl.BlockSpec(memory_space=pltpu.MemorySpace.SMEM),  # b2 scalar
                ],
                out_specs=pl.BlockSpec((tm, hw), lambda i: (i, 0)),
            ),
            compiler_params=pltpu.CompilerParams(
                dimension_semantics=("parallel",),
                vmem_limit_bytes=vmem_limit),
        )(feat_flat, w1_in, b1_row, w2_row, b2_s)
    else:
        # ---- two-kernel path: separable resize + attention MLP + streaming gate --
        x_small = _resize_bilinear_ac(feature, spatial_dim, spatial_dim)
        x_flat = x_small.reshape(m, s2).astype(jnp.bfloat16)
        w1_b = w1.astype(jnp.bfloat16)

        # Gate tiling: couple hw_tile and row tile so blocks land in the MiB range.
        tile_cap = max(512 * 1024, budget // 5)         # in/out double-buffered + slack
        hw_tile = _pick_hw_tile(hw, max(128, tile_cap // (8 * itemsize)))
        rows_cap = min(_MAX_TM, max(8, tile_cap // (hw_tile * itemsize)))
        tm, mp = _row_tiling(m, rows_cap)
        if mp != m:
            feat_flat = jnp.pad(feat_flat, ((0, mp - m), (0, 0)))
            x_flat = jnp.pad(x_flat, ((0, mp - m), (0, 0)))

        # (mp, 1) attention vector from a tiny row-tiled MLP kernel.
        tm_a, _ = _row_tiling(mp, 1024)
        a_vec = pl.pallas_call(
            slam_attn_kernel,
            out_shape=jax.ShapeDtypeStruct((mp, 1), jnp.float32),
            grid_spec=pltpu.PrefetchScalarGridSpec(
                num_scalar_prefetch=0,
                grid=(mp // tm_a,),
                in_specs=[
                    pl.BlockSpec((tm_a, s2), lambda i: (i, 0)),         # resized rows
                    pl.BlockSpec((s2, hidden), lambda i: (0, 0)),       # W1 (bf16)
                    pl.BlockSpec((1, hidden), lambda i: (0, 0)),        # b1
                    pl.BlockSpec((1, hidden), lambda i: (0, 0)),        # w2 row
                    pl.BlockSpec(memory_space=pltpu.MemorySpace.SMEM),  # b2 scalar
                ],
                out_specs=pl.BlockSpec((tm_a, 1), lambda i: (i, 0)),
            ),
            compiler_params=pltpu.CompilerParams(
                dimension_semantics=("parallel",),
                vmem_limit_bytes=vmem_limit),
        )(x_flat, w1_b, b1_row, w2_row, b2_s)

        # Streaming gate: no scratch / no pl.when -> both grid axes are parallel.
        out_flat = pl.pallas_call(
            slam_gate_kernel,
            out_shape=jax.ShapeDtypeStruct((mp, hw), feature.dtype),
            grid_spec=pltpu.PrefetchScalarGridSpec(
                num_scalar_prefetch=0,
                grid=(mp // tm, hw // hw_tile),
                in_specs=[
                    pl.BlockSpec((tm, 1), lambda i, j: (i, 0)),         # gate values
                    pl.BlockSpec((tm, hw_tile), lambda i, j: (i, j)),   # feature rows
                ],
                out_specs=pl.BlockSpec((tm, hw_tile), lambda i, j: (i, j)),
            ),
            compiler_params=pltpu.CompilerParams(
                dimension_semantics=("parallel", "parallel"),
                vmem_limit_bytes=vmem_limit),
        )(a_vec, feat_flat)

    if mp != m:
        out_flat = out_flat[:m]
    return out_flat.reshape(n, c, h, w)


# ----------------------------------------------------------------------------
# Pure-JAX reference (mirrors the PyTorch forward)
# ----------------------------------------------------------------------------
def slam_reference(feature, w1, b1, w2, b2, spatial_dim, *, bf16_matmul=False):
    n, c, h, w = feature.shape
    x = _resize_bilinear_ac(feature, spatial_dim, spatial_dim)
    x = x.reshape(n * c, spatial_dim * spatial_dim)
    if bf16_matmul:  # match the kernel's bf16 MXU path for tight comparison
        hdd = jnp.matmul(x.astype(jnp.bfloat16), w1.astype(jnp.bfloat16),
                         preferred_element_type=jnp.float32)
    else:
        hdd = jnp.matmul(x.astype(jnp.float32), w1.astype(jnp.float32),
                         preferred_element_type=jnp.float32)
    hdd = jnp.maximum(hdd + b1.reshape(1, -1).astype(jnp.float32), 0.0)
    logit = jnp.sum(hdd * w2.reshape(1, -1).astype(jnp.float32),
                    axis=-1, keepdims=True) + b2.reshape(()).astype(jnp.float32)
    a = jax.nn.sigmoid(logit).reshape(n, c, 1, 1)
    return (feature * a.astype(feature.dtype)).astype(feature.dtype)


if __name__ == "__main__":
    spatial_dim = 16
    s2 = spatial_dim * spatial_dim

    key = jax.random.PRNGKey(0)
    k_f1, k_f2, k_f3, k_w1, k_b1, k_w2, k_b2 = jax.random.split(key, 7)

    w1 = jax.random.normal(k_w1, (s2, 512), jnp.float32) / jnp.sqrt(float(s2))
    b1 = jax.random.normal(k_b1, (1, 512), jnp.float32) * 0.01
    w2 = jax.random.normal(k_w2, (512, 1), jnp.float32) / jnp.sqrt(512.0)
    b2 = jax.random.normal(k_b2, (1, 1), jnp.float32) * 0.01

    # Case 1: h == spatial_dim -> fused single-read kernel (no interpolation).
    feat1 = jax.random.normal(k_f1, (2, 4, 16, 16), jnp.float32)
    out1 = jax.block_until_ready(
        slam_forward(feat1, w1, b1, w2, b2, spatial_dim=spatial_dim))
    assert out1.shape == feat1.shape
    assert jnp.allclose(
        out1, slam_reference(feat1, w1, b1, w2, b2, spatial_dim, bf16_matmul=True),
        atol=1e-3, rtol=1e-3), "fused path mismatch"
    assert jnp.allclose(
        out1, slam_reference(feat1, w1, b1, w2, b2, spatial_dim),
        atol=5e-2), "fused path far from f32 spec"

    # Case 2: resize folded into W1 (W1_eff fits VMEM) -> single-pass fused kernel.
    feat2 = jax.random.normal(k_f2, (2, 4, 64, 64), jnp.float32)
    out2 = jax.block_until_ready(
        slam_forward(feat2, w1, b1, w2, b2, spatial_dim=spatial_dim))
    assert out2.shape == feat2.shape
    assert jnp.allclose(
        out2, slam_reference(feat2, w1, b1, w2, b2, spatial_dim),
        atol=5e-2), "folded path far from f32 spec"

    # Case 3: large H*W -> separable resize + attention kernel + streaming gate.
    feat3 = jax.random.normal(k_f3, (2, 4, 96, 96), jnp.float32)
    out3 = jax.block_until_ready(
        slam_forward(feat3, w1, b1, w2, b2, spatial_dim=spatial_dim))
    assert out3.shape == feat3.shape
    assert jnp.allclose(
        out3, slam_reference(feat3, w1, b1, w2, b2, spatial_dim, bf16_matmul=True),
        atol=1e-3, rtol=1e-3), "tiled path mismatch"
    assert jnp.allclose(
        out3, slam_reference(feat3, w1, b1, w2, b2, spatial_dim),
        atol=5e-2), "tiled path far from f32 spec"

    print("KERNEL_OK")
</pallas_src>

<mosaic_0001>
module attributes {stable_mosaic.version = 11 : i64} {
  func.func @slam_fused_kernel(%arg0: i32, %arg1: memref<8x256xf32, #tpu.memory_space<vmem>>, %arg2: memref<256x512xbf16, #tpu.memory_space<vmem>>, %arg3: memref<1x512xf32, #tpu.memory_space<vmem>>, %arg4: memref<1x512xf32, #tpu.memory_space<vmem>>, %arg5: memref<1x1xf32, #tpu.memory_space<smem>>, %arg6: memref<8x256xf32, #tpu.memory_space<vmem>>) attributes {dimension_semantics = [#tpu.dimension_semantics<parallel>], iteration_bounds = array<i64: 1>, scalar_prefetch = 0 : i64, scratch_operands = 0 : i64, tpu.core_type = #tpu.core_type<tc>, window_params = [{transform_indices = @transform_0, window_bounds = array<i64: 8, 256>}, {pipeline_mode = #tpu.pipeline_mode<synchronous>, transform_indices = @transform_1, window_bounds = array<i64: 256, 512>}, {pipeline_mode = #tpu.pipeline_mode<synchronous>, transform_indices = @transform_2, window_bounds = array<i64: 1, 512>}, {pipeline_mode = #tpu.pipeline_mode<synchronous>, transform_indices = @transform_3, window_bounds = array<i64: 1, 512>}, {transform_indices = @transform_4, window_bounds = array<i64: 1, 1>}, {transform_indices = @transform_5, window_bounds = array<i64: 8, 256>}]} {
    %c0 = arith.constant 0 : index
    %c0_0 = arith.constant 0 : index
    %0 = vector.load %arg1[%c0, %c0_0] : memref<8x256xf32, #tpu.memory_space<vmem>>, vector<8x256xf32>
    %1 = arith.truncf %0 : vector<8x256xf32> to vector<8x256xbf16>
    %c0_1 = arith.constant 0 : index
    %c0_2 = arith.constant 0 : index
    %2 = vector.load %arg2[%c0_1, %c0_2] : memref<256x512xbf16, #tpu.memory_space<vmem>>, vector<256x512xbf16>
    %cst = arith.constant dense<0.000000e+00> : vector<8x512xf32>
    %3 = tpu.matmul %1, %2, %cst {dimension_numbers = #tpu.dot_dimension_numbers<[1], [0], [0], [1], [0, 0, 1, 1], [], []>} : vector<8x256xbf16>, vector<256x512xbf16>, vector<8x512xf32> -> vector<8x512xf32>
    %c0_3 = arith.constant 0 : index
    %c0_4 = arith.constant 0 : index
    %4 = vector.load %arg3[%c0_3, %c0_4] : memref<1x512xf32, #tpu.memory_space<vmem>>, vector<1x512xf32>
    %5 = vector.broadcast %4 : vector<1x512xf32> to vector<8x512xf32>
    %6 = arith.addf %3, %5 : vector<8x512xf32>
    %cst_5 = arith.constant 0.000000e+00 : f32
    %7 = vector.broadcast %cst_5 : f32 to vector<8x512xf32>
    %8 = arith.maximumf %6, %7 : vector<8x512xf32>
    %c0_6 = arith.constant 0 : index
    %c0_7 = arith.constant 0 : index
    %9 = vector.load %arg4[%c0_6, %c0_7] : memref<1x512xf32, #tpu.memory_space<vmem>>, vector<1x512xf32>
    %10 = vector.broadcast %9 : vector<1x512xf32> to vector<8x512xf32>
    %11 = arith.mulf %8, %10 : vector<8x512xf32>
    %cst_8 = arith.constant dense<0.000000e+00> : vector<8xf32>
    %12 = vector.multi_reduction <add>, %11, %cst_8 [1] : vector<8x512xf32> to vector<8xf32>
    %13 = vector.shape_cast %12 : vector<8xf32> to vector<8x1xf32>
    %c0_9 = arith.constant 0 : index
    %c0_10 = arith.constant 0 : index
    %14 = memref.load %arg5[%c0_9, %c0_10] : memref<1x1xf32, #tpu.memory_space<smem>>
    %15 = vector.broadcast %14 : f32 to vector<8x1xf32>
    %16 = arith.addf %13, %15 : vector<8x1xf32>
    %17 = arith.negf %16 : vector<8x1xf32>
    %18 = math.exp %17 : vector<8x1xf32>
    %cst_11 = arith.constant 1.000000e+00 : f32
    %19 = vector.broadcast %cst_11 : f32 to vector<8x1xf32>
    %20 = arith.addf %19, %18 : vector<8x1xf32>
    %21 = arith.divf %19, %20 : vector<8x1xf32>
    %22 = vector.broadcast %21 : vector<8x1xf32> to vector<8x256xf32>
    %23 = arith.mulf %0, %22 : vector<8x256xf32>
    %c0_12 = arith.constant 0 : index
    %c0_13 = arith.constant 0 : index
    %24 = vector.load %arg6[%c0_12, %c0_13] : memref<8x256xf32, #tpu.memory_space<vmem>>, vector<8x256xf32>
    tpu.vector_store %arg6[%c0_12, %c0_13], %23 {strides = array<i32>} : memref<8x256xf32, #tpu.memory_space<vmem>>, vector<8x256xf32>,
    return
  }
  func.func @transform_0(%arg0: i32) -> (i32, i32) {
    %c0_i32 = arith.constant 0 : i32
    %c0_i32_0 = arith.constant 0 : i32
    return %arg0, %c0_i32 : i32, i32
  }
  func.func @transform_1(%arg0: i32) -> (i32, i32) {
    %c0_i32 = arith.constant 0 : i32
    %c0_i32_0 = arith.constant 0 : i32
    %c0_i32_1 = arith.constant 0 : i32
    return %c0_i32, %c0_i32_0 : i32, i32
  }
  func.func @transform_2(%arg0: i32) -> (i32, i32) {
    %c0_i32 = arith.constant 0 : i32
    %c0_i32_0 = arith.constant 0 : i32
    %c0_i32_1 = arith.constant 0 : i32
    return %c0_i32, %c0_i32_0 : i32, i32
  }
  func.func @transform_3(%arg0: i32) -> (i32, i32) {
    %c0_i32 = arith.constant 0 : i32
    %c0_i32_0 = arith.constant 0 : i32
    %c0_i32_1 = arith.constant 0 : i32
    return %c0_i32, %c0_i32_0 : i32, i32
  }
  func.func @transform_4(%arg0: i32) -> (i32, i32) {
    %c0_i32 = arith.constant 0 : i32
    %c0_i32_0 = arith.constant 0 : i32
    %c0_i32_1 = arith.constant 0 : i32
    return %c0_i32, %c0_i32_0 : i32, i32
  }
  func.func @transform_5(%arg0: i32) -> (i32, i32) {
    %c0_i32 = arith.constant 0 : i32
    %c0_i32_0 = arith.constant 0 : i32
    return %arg0, %c0_i32 : i32, i32
  }
}

</mosaic_0001>

<llo_original>
// kernel: slam_forward.1
$region0: #{slam_forward.1}
  #allocation0 [shape = 'u32[]', space=smem, size = 0x4, offset = 0x4, fixed_abs, tag = 'smem constant byte address 0x4 - core index']
  #allocation1 [shape = 'u32[72,128]{1,0:T(1,128)}', space=vmem, size = 0x9000, scoped, tag = 'internal scratch']
  #allocation2 [shape = 'f32[1,1]{1,0:T(1,128)S(6)}', space=smem, size = 0x200, scoped, tag = 'scoped memory for slam_forward.1']
  %s0 = inlined_call_operand.vmem [shape: f32[8,256], index: 0, kind: input, shape index: {}]
  %s1 = inlined_call_operand.vmem [shape: bf16[256,512], index: 1, kind: input, shape index: {}]
  %s2 = inlined_call_operand.vmem [shape: f32[1,512], index: 2, kind: input, shape index: {}]
  %s3 = inlined_call_operand.vmem [shape: f32[1,512], index: 3, kind: input, shape index: {}]
  %s4 = inlined_call_operand.<no memory space> [shape: f32[1,1], index: 4, kind: input, shape index: {}]
  %s5 = inlined_call_operand.vmem [shape: f32[8,256], index: 5, kind: output, shape index: {}]
  %s6 = sld [smem:[#allocation0]]
  $region30: #{slam_forward.1} parent=0
    _
  %s8 = ssub.s32 1, %s6
  %s9 = scalar_select 0, %s8, %s6
  %10 = sst [smem:[#allocation2]] %s4
  // Predicated region
  $region2: #{slam_forward.1} parent=0 // pred_check
    _
  $region3: #{slam_forward.1} parent=0 // pred_check_branch
    %12 = sbr.rel (0) target = $region5
  $region4: #{slam_forward.1} parent=0 // pred_region
    _
  $region5: #{slam_forward.1} parent=0 // pred_fallthru
    _
  // Predicated region
  $region6: #{slam_forward.1} parent=0 // pred_check
    _
  $region7: #{slam_forward.1} parent=0 // pred_check_branch
    %14 = sbr.rel (0) target = $region9
  $region8: #{slam_forward.1} parent=0 // pred_region
    _
  $region9: #{slam_forward.1} parent=0 // pred_fallthru
    _
  // Predicated region
  $region10: #{slam_forward.1} parent=0 // pred_check
    _
  $region11: #{slam_forward.1} parent=0 // pred_check_branch
    %16 = sbr.rel (0) target = $region13
  $region12: #{slam_forward.1} parent=0 // pred_region
    _
  $region13: #{slam_forward.1} parent=0 // pred_fallthru
    _
  // Predicated region
  $region14: #{slam_forward.1} parent=0 // pred_check
    _
  $region15: #{slam_forward.1} parent=0 // pred_check_branch
    %18 = sbr.rel (0) target = $region17
  $region16: #{slam_forward.1} parent=0 // pred_region
    _
  $region17: #{slam_forward.1} parent=0 // pred_fallthru
    _
  // Predicated region
  $region18: #{slam_forward.1} parent=0 // pred_check
    _
  $region19: #{slam_forward.1} parent=0 // pred_check_branch
    %20 = sbr.rel (0) target = $region21
  $region20: #{slam_forward.1} parent=0 // pred_region
    _
  $region21: #{slam_forward.1} parent=0 // pred_fallthru
    _
  %v21 = vld [vmem:[%s0] sm:$0xff]
  %v22 = vld [vmem:[%s0 + $0x8] sm:$0xff]
  %v23 = vpack.c.bf16 %v21, %v21
  %v24 = vpack.c.bf16 %v22, %v22
  %v25 = vld [vmem:[%s1] sm:$0xff]
  %v26 = vld [vmem:[%s1 + $0x8] sm:$0xff]
  %v27 = vld [vmem:[%s1 + $0x10] sm:$0xff]
  %v28 = vld [vmem:[%s1 + $0x18] sm:$0xff]
  %v29 = vld [vmem:[%s1 + $0x20] sm:$0xff]
  %v30 = vld [vmem:[%s1 + $0x28] sm:$0xff]
  %v31 = vld [vmem:[%s1 + $0x30] sm:$0xff]
  %v32 = vld [vmem:[%s1 + $0x38] sm:$0xff]
  %v33 = vld [vmem:[%s1 + $0x40] sm:$0xff]
  %v34 = vld [vmem:[%s1 + $0x48] sm:$0xff]
  %v35 = vld [vmem:[%s1 + $0x50] sm:$0xff]
  %v36 = vld [vmem:[%s1 + $0x58] sm:$0xff]
  %v37 = vld [vmem:[%s1 + $0x60] sm:$0xff]
  %v38 = vld [vmem:[%s1 + $0x68] sm:$0xff]
  %v39 = vld [vmem:[%s1 + $0x70] sm:$0xff]
  %v40 = vld [vmem:[%s1 + $0x78] sm:$0xff]
  %v41 = vld [vmem:[%s1 + $0x80] sm:$0xff]
  %v42 = vld [vmem:[%s1 + $0x88] sm:$0xff]
  %v43 = vld [vmem:[%s1 + $0x90] sm:$0xff]
  %v44 = vld [vmem:[%s1 + $0x98] sm:$0xff]
  %v45 = vld [vmem:[%s1 + $0xa0] sm:$0xff]
  %v46 = vld [vmem:[%s1 + $0xa8] sm:$0xff]
  %v47 = vld [vmem:[%s1 + $0xb0] sm:$0xff]
  %v48 = vld [vmem:[%s1 + $0xb8] sm:$0xff]
  %v49 = vld [vmem:[%s1 + $0xc0] sm:$0xff]
  %v50 = vld [vmem:[%s1 + $0xc8] sm:$0xff]
  %v51 = vld [vmem:[%s1 + $0xd0] sm:$0xff]
  %v52 = vld [vmem:[%s1 + $0xd8] sm:$0xff]
  %v53 = vld [vmem:[%s1 + $0xe0] sm:$0xff]
  %v54 = vld [vmem:[%s1 + $0xe8] sm:$0xff]
  %v55 = vld [vmem:[%s1 + $0xf0] sm:$0xff]
  %v56 = vld [vmem:[%s1 + $0xf8] sm:$0xff]
  %v57 = vld [vmem:[%s1 + $0x100] sm:$0xff]
  %v58 = vld [vmem:[%s1 + $0x108] sm:$0xff]
  %v59 = vld [vmem:[%s1 + $0x110] sm:$0xff]
  %v60 = vld [vmem:[%s1 + $0x118] sm:$0xff]
  %v61 = vld [vmem:[%s1 + $0x120] sm:$0xff]
  %v62 = vld [vmem:[%s1 + $0x128] sm:$0xff]
  %v63 = vld [vmem:[%s1 + $0x130] sm:$0xff]
  %v64 = vld [vmem:[%s1 + $0x138] sm:$0xff]
  %v65 = vld [vmem:[%s1 + $0x140] sm:$0xff]
  %v66 = vld [vmem:[%s1 + $0x148] sm:$0xff]
  %v67 = vld [vmem:[%s1 + $0x150] sm:$0xff]
  %v68 = vld [vmem:[%s1 + $0x158] sm:$0xff]
  %v69 = vld [vmem:[%s1 + $0x160] sm:$0xff]
  %v70 = vld [vmem:[%s1 + $0x168] sm:$0xff]
  %v71 = vld [vmem:[%s1 + $0x170] sm:$0xff]
  %v72 = vld [vmem:[%s1 + $0x178] sm:$0xff]
  %v73 = vld [vmem:[%s1 + $0x180] sm:$0xff]
  %v74 = vld [vmem:[%s1 + $0x188] sm:$0xff]
  %v75 = vld [vmem:[%s1 + $0x190] sm:$0xff]
  %v76 = vld [vmem:[%s1 + $0x198] sm:$0xff]
  %v77 = vld [vmem:[%s1 + $0x1a0] sm:$0xff]
  %v78 = vld [vmem:[%s1 + $0x1a8] sm:$0xff]
  %v79 = vld [vmem:[%s1 + $0x1b0] sm:$0xff]
  %v80 = vld [vmem:[%s1 + $0x1b8] sm:$0xff]
  %v81 = vld [vmem:[%s1 + $0x1c0] sm:$0xff]
  %v82 = vld [vmem:[%s1 + $0x1c8] sm:$0xff]
  %v83 = vld [vmem:[%s1 + $0x1d0] sm:$0xff]
  %v84 = vld [vmem:[%s1 + $0x1d8] sm:$0xff]
  %v85 = vld [vmem:[%s1 + $0x1e0] sm:$0xff]
  %v86 = vld [vmem:[%s1 + $0x1e8] sm:$0xff]
  %v87 = vld [vmem:[%s1 + $0x1f0] sm:$0xff]
  %v88 = vld [vmem:[%s1 + $0x1f8] sm:$0xff]
  %v89 = vld [vmem:[%s2] sm:$0xf]
  %v91 = vperm.slane %v89, 0
  %v92 = vperm.slane %v89, 1
  %v93 = vperm.slane %v89, 2
  %v94 = vperm.slane %v89, 3
  %v163 = vunpack.c.l.b16 %v25
  %v164 = vunpack.c.h.b16 %v25
  %v165 = vunpack.c.l.b16 %v26
  %v166 = vunpack.c.h.b16 %v26
  %v167 = vunpack.c.l.b16 %v27
  %v168 = vunpack.c.h.b16 %v27
  %v169 = vunpack.c.l.b16 %v28
  %v170 = vunpack.c.h.b16 %v28
  %v171 = vunpack.c.l.b16 %v29
  %v172 = vunpack.c.h.b16 %v29
  %v173 = vunpack.c.l.b16 %v30
  %v174 = vunpack.c.h.b16 %v30
  %v175 = vunpack.c.l.b16 %v31
  %v176 = vunpack.c.h.b16 %v31
  %v177 = vunpack.c.l.b16 %v32
  %v178 = vunpack.c.h.b16 %v32
  %v179 = vunpack.c.l.b16 %v33
  %v180 = vunpack.c.h.b16 %v33
  %v181 = vunpack.c.l.b16 %v34
  %v182 = vunpack.c.h.b16 %v34
  %v183 = vunpack.c.l.b16 %v35
  %v184 = vunpack.c.h.b16 %v35
  %v185 = vunpack.c.l.b16 %v36
  %v186 = vunpack.c.h.b16 %v36
  %v187 = vunpack.c.l.b16 %v37
  %v188 = vunpack.c.h.b16 %v37
  %v189 = vunpack.c.l.b16 %v38
  %v190 = vunpack.c.h.b16 %v38
  %v191 = vunpack.c.l.b16 %v39
  %v192 = vunpack.c.h.b16 %v39
  %v193 = vunpack.c.l.b16 %v40
  %v194 = vunpack.c.h.b16 %v40
  %v195 = vunpack.c.l.b16 %v41
  %v196 = vunpack.c.h.b16 %v41
  %v197 = vunpack.c.l.b16 %v42
  %v198 = vunpack.c.h.b16 %v42
  %v199 = vunpack.c.l.b16 %v43
  %v200 = vunpack.c.h.b16 %v43
  %v201 = vunpack.c.l.b16 %v44
  %v202 = vunpack.c.h.b16 %v44
  %v203 = vunpack.c.l.b16 %v45
  %v204 = vunpack.c.h.b16 %v45
  %v205 = vunpack.c.l.b16 %v46
  %v206 = vunpack.c.h.b16 %v46
  %v207 = vunpack.c.l.b16 %v47
  %v208 = vunpack.c.h.b16 %v47
  %v209 = vunpack.c.l.b16 %v48
  %v210 = vunpack.c.h.b16 %v48
  %v211 = vunpack.c.l.b16 %v49
  %v212 = vunpack.c.h.b16 %v49
  %v213 = vunpack.c.l.b16 %v50
  %v214 = vunpack.c.h.b16 %v50
  %v215 = vunpack.c.l.b16 %v51
  %v216 = vunpack.c.h.b16 %v51
  %v217 = vunpack.c.l.b16 %v52
  %v218 = vunpack.c.h.b16 %v52
  %v219 = vunpack.c.l.b16 %v53
  %v220 = vunpack.c.h.b16 %v53
  %v221 = vunpack.c.l.b16 %v54
  %v222 = vunpack.c.h.b16 %v54
  %v223 = vunpack.c.l.b16 %v55
  %v224 = vunpack.c.h.b16 %v55
  %v225 = vunpack.c.l.b16 %v56
  %v226 = vunpack.c.h.b16 %v56
  %v227 = vunpack.c.l.b16 %v57
  %v228 = vunpack.c.h.b16 %v57
  %v229 = vunpack.c.l.b16 %v58
  %v230 = vunpack.c.h.b16 %v58
  %v231 = vunpack.c.l.b16 %v59
  %v232 = vunpack.c.h.b16 %v59
  %v233 = vunpack.c.l.b16 %v60
  %v234 = vunpack.c.h.b16 %v60
  %v235 = vunpack.c.l.b16 %v61
  %v236 = vunpack.c.h.b16 %v61
  %v237 = vunpack.c.l.b16 %v62
  %v238 = vunpack.c.h.b16 %v62
  %v239 = vunpack.c.l.b16 %v63
  %v240 = vunpack.c.h.b16 %v63
  %v241 = vunpack.c.l.b16 %v64
  %v242 = vunpack.c.h.b16 %v64
  %v243 = vunpack.c.l.b16 %v65
  %v244 = vunpack.c.h.b16 %v65
  %v245 = vunpack.c.l.b16 %v66
  %v246 = vunpack.c.h.b16 %v66
  %v247 = vunpack.c.l.b16 %v67
  %v248 = vunpack.c.h.b16 %v67
  %v249 = vunpack.c.l.b16 %v68
  %v250 = vunpack.c.h.b16 %v68
  %v251 = vunpack.c.l.b16 %v69
  %v252 = vunpack.c.h.b16 %v69
  %v253 = vunpack.c.l.b16 %v70
  %v254 = vunpack.c.h.b16 %v70
  %v255 = vunpack.c.l.b16 %v71
  %v256 = vunpack.c.h.b16 %v71
  %v257 = vunpack.c.l.b16 %v72
  %v258 = vunpack.c.h.b16 %v72
  %v259 = vunpack.c.l.b16 %v73
  %v260 = vunpack.c.h.b16 %v73
  %v261 = vunpack.c.l.b16 %v74
  %v262 = vunpack.c.h.b16 %v74
  %v263 = vunpack.c.l.b16 %v75
  %v264 = vunpack.c.h.b16 %v75
  %v265 = vunpack.c.l.b16 %v76
  %v266 = vunpack.c.h.b16 %v76
  %v267 = vunpack.c.l.b16 %v77
  %v268 = vunpack.c.h.b16 %v77
  %v269 = vunpack.c.l.b16 %v78
  %v270 = vunpack.c.h.b16 %v78
  %v271 = vunpack.c.l.b16 %v79
  %v272 = vunpack.c.h.b16 %v79
  %v273 = vunpack.c.l.b16 %v80
  %v274 = vunpack.c.h.b16 %v80
  %v275 = vunpack.c.l.b16 %v81
  %v276 = vunpack.c.h.b16 %v81
  %v277 = vunpack.c.l.b16 %v82
  %v278 = vunpack.c.h.b16 %v82
  %v279 = vunpack.c.l.b16 %v83
  %v280 = vunpack.c.h.b16 %v83
  %v281 = vunpack.c.l.b16 %v84
  %v282 = vunpack.c.h.b16 %v84
  %v283 = vunpack.c.l.b16 %v85
  %v284 = vunpack.c.h.b16 %v85
  %v285 = vunpack.c.l.b16 %v86
  %v286 = vunpack.c.h.b16 %v86
  %v287 = vunpack.c.l.b16 %v87
  %v288 = vunpack.c.h.b16 %v87
  %v289 = vunpack.c.l.b16 %v88
  %v290 = vunpack.c.h.b16 %v88
  %v291 = vpack.c.b16 %v167, %v163
  %v292 = vpack.c.b16 %v168, %v164
  %v293 = vpack.c.b16 %v169, %v165
  %v294 = vpack.c.b16 %v170, %v166
  %v295 = vpack.c.b16 %v175, %v171
  %v296 = vpack.c.b16 %v176, %v172
  %v297 = vpack.c.b16 %v177, %v173
  %v298 = vpack.c.b16 %v178, %v174
  %v299 = vpack.c.b16 %v183, %v179
  %v300 = vpack.c.b16 %v184, %v180
  %v301 = vpack.c.b16 %v185, %v181
  %v302 = vpack.c.b16 %v186, %v182
  %v303 = vpack.c.b16 %v191, %v187
  %v304 = vpack.c.b16 %v192, %v188
  %v305 = vpack.c.b16 %v193, %v189
  %v306 = vpack.c.b16 %v194, %v190
  %v307 = vpack.c.b16 %v199, %v195
  %v308 = vpack.c.b16 %v200, %v196
  %v309 = vpack.c.b16 %v201, %v197
  %v310 = vpack.c.b16 %v202, %v198
  %v311 = vpack.c.b16 %v207, %v203
  %v312 = vpack.c.b16 %v208, %v204
  %v313 = vpack.c.b16 %v209, %v205
  %v314 = vpack.c.b16 %v210, %v206
  %v315 = vpack.c.b16 %v215, %v211
  %v316 = vpack.c.b16 %v216, %v212
  %v317 = vpack.c.b16 %v217, %v213
  %v318 = vpack.c.b16 %v218, %v214
  %v319 = vpack.c.b16 %v223, %v219
  %v320 = vpack.c.b16 %v224, %v220
  %v321 = vpack.c.b16 %v225, %v221
  %v322 = vpack.c.b16 %v226, %v222
  %v323 = vpack.c.b16 %v231, %v227
  %v324 = vpack.c.b16 %v232, %v228
  %v325 = vpack.c.b16 %v233, %v229
  %v326 = vpack.c.b16 %v234, %v230
  %v327 = vpack.c.b16 %v239, %v235
  %v328 = vpack.c.b16 %v240, %v236
  %v329 = vpack.c.b16 %v241, %v237
  %v330 = vpack.c.b16 %v242, %v238
  %v331 = vpack.c.b16 %v247, %v243
  %v332 = vpack.c.b16 %v248, %v244
  %v333 = vpack.c.b16 %v249, %v245
  %v334 = vpack.c.b16 %v250, %v246
  %v335 = vpack.c.b16 %v255, %v251
  %v336 = vpack.c.b16 %v256, %v252
  %v337 = vpack.c.b16 %v257, %v253
  %v338 = vpack.c.b16 %v258, %v254
  %v339 = vpack.c.b16 %v263, %v259
  %v340 = vpack.c.b16 %v264, %v260
  %v341 = vpack.c.b16 %v265, %v261
  %v342 = vpack.c.b16 %v266, %v262
  %v343 = vpack.c.b16 %v271, %v267
  %v344 = vpack.c.b16 %v272, %v268
  %v345 = vpack.c.b16 %v273, %v269
  %v346 = vpack.c.b16 %v274, %v270
  %v347 = vpack.c.b16 %v279, %v275
  %v348 = vpack.c.b16 %v280, %v276
  %v349 = vpack.c.b16 %v281, %v277
  %v350 = vpack.c.b16 %v282, %v278
  %v351 = vpack.c.b16 %v287, %v283
  %v352 = vpack.c.b16 %v288, %v284
  %v353 = vpack.c.b16 %v289, %v285
  %v354 = vpack.c.b16 %v290, %v286
  %419 = vmatpush.bf16.msra.mxu0 %v319
  %420 = vmatpush.bf16.msra.mxu0 %v315
  %421 = vmatpush.bf16.msra.mxu0 %v311
  %422 = vmatpush.bf16.msra.mxu0 %v307
  %423 = vmatpush.bf16.msra.mxu0 %v303
  %424 = vmatpush.bf16.msra.mxu0 %v299
  %425 = vmatpush.bf16.msra.mxu0 %v295
  %426 = vmatpush.bf16.msra.mxu0 %v291
  %427 = vmatmul.bf16.gmra.mxu0 %v23
  %v428 = vpop.f32.mrf.mxu0
  %v429 = vadd.f32 %v91, %v428
  %v430 = vpop.f32.mrf.mxu0
  %431 = vdwg.mxu0
  %432 = vmatpush.bf16.msra.mxu0 %v351
  %433 = vmatpush.bf16.msra.mxu0 %v347
  %434 = vmatpush.bf16.msra.mxu0 %v343
  %435 = vmatpush.bf16.msra.mxu0 %v339
  %436 = vmatpush.bf16.msra.mxu0 %v335
  %437 = vmatpush.bf16.msra.mxu0 %v331
  %438 = vmatpush.bf16.msra.mxu0 %v327
  %439 = vmatpush.bf16.msra.mxu0 %v323
  %440 = vmatmul.bf16.gmra.mxu0 %v24
  %v441 = vpop.f32.mrf.mxu0
  %v442 = vadd.f32 %v429, %v441
  %v443 = vpop.f32.mrf.mxu0
  %444 = vdwg.mxu0
  %445 = vmatpush.bf16.msra.mxu0 %v320
  %446 = vmatpush.bf16.msra.mxu0 %v316
  %447 = vmatpush.bf16.msra.mxu0 %v312
  %448 = vmatpush.bf16.msra.mxu0 %v308
  %449 = vmatpush.bf16.msra.mxu0 %v304
  %450 = vmatpush.bf16.msra.mxu0 %v300
  %451 = vmatpush.bf16.msra.mxu0 %v296
  %452 = vmatpush.bf16.msra.mxu0 %v292
  %453 = vmatmul.bf16.gmra.mxu0 %v23
  %v454 = vpop.f32.mrf.mxu0
  %v455 = vadd.f32 %v92, %v454
  %v456 = vpop.f32.mrf.mxu0
  %457 = vdwg.mxu0
  %458 = vmatpush.bf16.msra.mxu0 %v352
  %459 = vmatpush.bf16.msra.mxu0 %v348
  %460 = vmatpush.bf16.msra.mxu0 %v344
  %461 = vmatpush.bf16.msra.mxu0 %v340
  %462 = vmatpush.bf16.msra.mxu0 %v336
  %463 = vmatpush.bf16.msra.mxu0 %v332
  %464 = vmatpush.bf16.msra.mxu0 %v328
  %465 = vmatpush.bf16.msra.mxu0 %v324
  %466 = vmatmul.bf16.gmra.mxu0 %v24
  %v467 = vpop.f32.mrf.mxu0
  %v468 = vadd.f32 %v455, %v467
  %v469 = vpop.f32.mrf.mxu0
  %470 = vdwg.mxu0
  %471 = vmatpush.bf16.msra.mxu0 %v321
  %472 = vmatpush.bf16.msra.mxu0 %v317
  %473 = vmatpush.bf16.msra.mxu0 %v313
  %474 = vmatpush.bf16.msra.mxu0 %v309
  %475 = vmatpush.bf16.msra.mxu0 %v305
  %476 = vmatpush.bf16.msra.mxu0 %v301
  %477 = vmatpush.bf16.msra.mxu0 %v297
  %478 = vmatpush.bf16.msra.mxu0 %v293
  %479 = vmatmul.bf16.gmra.mxu0 %v23
  %v480 = vpop.f32.mrf.mxu0
  %v481 = vadd.f32 %v93, %v480
  %v482 = vpop.f32.mrf.mxu0
  %483 = vdwg.mxu0
  %484 = vmatpush.bf16.msra.mxu0 %v353
  %485 = vmatpush.bf16.msra.mxu0 %v349
  %486 = vmatpush.bf16.msra.mxu0 %v345
  %487 = vmatpush.bf16.msra.mxu0 %v341
  %488 = vmatpush.bf16.msra.mxu0 %v337
  %489 = vmatpush.bf16.msra.mxu0 %v333
  %490 = vmatpush.bf16.msra.mxu0 %v329
  %491 = vmatpush.bf16.msra.mxu0 %v325
  %492 = vmatmul.bf16.gmra.mxu0 %v24
  %v493 = vpop.f32.mrf.mxu0
  %v494 = vadd.f32 %v481, %v493
  %v495 = vpop.f32.mrf.mxu0
  %496 = vdwg.mxu0
  %497 = vmatpush.bf16.msra.mxu0 %v322
  %498 = vmatpush.bf16.msra.mxu0 %v318
  %499 = vmatpush.bf16.msra.mxu0 %v314
  %500 = vmatpush.bf16.msra.mxu0 %v310
  %501 = vmatpush.bf16.msra.mxu0 %v306
  %502 = vmatpush.bf16.msra.mxu0 %v302
  %503 = vmatpush.bf16.msra.mxu0 %v298
  %504 = vmatpush.bf16.msra.mxu0 %v294
  %505 = vmatmul.bf16.gmra.mxu0 %v23
  %v506 = vpop.f32.mrf.mxu0
  %v507 = vadd.f32 %v94, %v506
  %v508 = vpop.f32.mrf.mxu0
  %509 = vdwg.mxu0
  %510 = vmatpush.bf16.msra.mxu0 %v354
  %511 = vmatpush.bf16.msra.mxu0 %v350
  %512 = vmatpush.bf16.msra.mxu0 %v346
  %513 = vmatpush.bf16.msra.mxu0 %v342
  %514 = vmatpush.bf16.msra.mxu0 %v338
  %515 = vmatpush.bf16.msra.mxu0 %v334
  %516 = vmatpush.bf16.msra.mxu0 %v330
  %517 = vmatpush.bf16.msra.mxu0 %v326
  %518 = vmatmul.bf16.gmra.mxu0 %v24
  %v519 = vpop.f32.mrf.mxu0
  %v520 = vadd.f32 %v507, %v519
  %v521 = vpop.f32.mrf.mxu0
  %522 = vdwg.mxu0
  %v523 = vmax.f32 %v442, 0.0
  %v524 = vmax.f32 %v468, 0.0
  %v525 = vmax.f32 %v494, 0.0
  %v526 = vmax.f32 %v520, 0.0
  %v527 = vld [vmem:[%s3] sm:$0xf]
  %v529 = vperm.slane %v527, 0
  %v530 = vperm.slane %v527, 1
  %v531 = vperm.slane %v527, 2
  %v532 = vperm.slane %v527, 3
  %v537 = vmul.f32 %v523, %v529
  %v538 = vmul.f32 %v524, %v530
  %v539 = vmul.f32 %v525, %v531
  %v540 = vmul.f32 %v526, %v532
  %v541 = vadd.f32 %v537, %v538
  %v542 = vadd.f32 %v541, %v539
  %v543 = vadd.f32 %v542, %v540
  %544 = vadd.xlane.f32.xlu0 %v543
  %v545 = vpop.xlane.xlu0 %544
  %s546 = sld [smem:[#allocation2]]
  %v547 = vstv %s546
  %v548 = vadd.f32 %v545, %v547
  %v549 = vxor.u32 %v548, 2147483648
  %v550 = vmul.f32 %v549, 1.442695
  %v551 = vpow.pop %v550
  %v552 = vadd.f32 %v551, 1.0
  %v553 = vrcp.pop %v552
  %v554 = vmul.f32 %v552, %v553
  %v555 = vsub.f32 1.0, %v554
  %v556 = vmul.f32 %v553, %v555
  %v557 = vadd.f32 %v553, %v556
  %vm558 = vweird.f32 %v552
  %vm559 = vweird.f32 %v553
  %vm560 = vmor %vm558, %vm559
  %v561 = vsel %vm560, %v553, %v557
  %v562 = vand.u32 2147483647, %v552
  %vm563 = vcmp.eq.f32.partialorder %v562, 8.507059e+37
  %v564 = vand.u32 %v552, 2147483648
  %v565 = vor.u32 1.1754944e-38, %v564
  %v566 = vsel %vm563, %v565, %v561
  %v567 = vmul.f32 1.0, %v566
  %v568 = vmul.f32 %v21, %v567
  %v569 = vmul.f32 %v22, %v567
  %570 = vst [vmem:[%s5] sm:$0xff] %v568
  %571 = vst [vmem:[%s5 + $0x8] sm:$0xff] %v569
  // Predicated region
  $region22: #{slam_forward.1} parent=0 // pred_check
    _
  $region23: #{slam_forward.1} parent=0 // pred_check_branch
    %573 = sbr.rel (0) target = $region25
  $region24: #{slam_forward.1} parent=0 // pred_region
    _
  $region25: #{slam_forward.1} parent=0 // pred_fallthru
    _
  // Predicated region
  $region26: #{slam_forward.1} parent=0 // pred_check
    _
  $region27: #{slam_forward.1} parent=0 // pred_check_branch
    %575 = sbr.rel (0) target = $region29
  $region28: #{slam_forward.1} parent=0 // pred_region
    _
  $region29: #{slam_forward.1} parent=0 // pred_fallthru
    _

</llo_original>
